<compile_context>
chip_gen: v6e
topology: v6e:2x2x1
jax: 0.10.0
libtpu: 0.0.40
codegen_flags: <defaults>
</compile_context>

<pallas_src>
import math
import functools

import jax
import jax.numpy as jnp
from jax import lax
from jax.experimental import pallas as pl
from jax.experimental.pallas import tpu as pltpu


def _round_up(a, b):
    return (a + b - 1) // b * b


def _gelu_exact(x):
    # Matches torch.nn.GELU() default (exact erf formulation), computed in f32.
    return 0.5 * x * (1.0 + lax.erf(x * (1.0 / math.sqrt(2.0))))


def _tpu_generation():
    """Best-effort TPU generation detection (5 / 6 / 7), None if unknown."""
    try:
        kind = jax.devices()[0].device_kind.lower()
    except Exception:
        return None
    for gen, tags in ((7, ("v7", "tpu7")), (6, ("v6", "tpu6")), (5, ("v5", "tpu5"))):
        if any(t in kind for t in tags):
            return gen
    return None


def _pick_tk(d_hid_p, tk_target):
    """Largest multiple of 128 <= tk_target that divides the 128-padded hidden dim."""
    tk_target = max(128, min(_round_up(tk_target, 128), d_hid_p))
    for tk in range(tk_target, 127, -128):
        if d_hid_p % tk == 0:
            return tk
    return 128  # always divides d_hid_p (multiple of 128)


def _vmem_bytes(tm, tk, d_in_p, d_out_p, cbytes, obytes, use_scratch):
    """Estimated per-step VMEM footprint (double-buffered inputs/outputs + scratch)."""
    b = 2 * tm * d_in_p * cbytes        # x tile
    b += 2 * d_in_p * tk * cbytes       # W1 tile
    b += 2 * 8 * tk * 4                 # b1 tile (sublane-padded)
    b += 2 * tk * d_out_p * cbytes      # W2 tile
    b += 2 * 8 * d_out_p * 4            # b2
    b += 2 * tm * d_out_p * obytes      # output tile
    if use_scratch:
        b += tm * d_out_p * 4           # f32 accumulator
    b += 2 * tm * tk * 4                # f32 GELU intermediate (compiler scratch, generous)
    return b


def _make_kernel(accumulate_in_out):
    """accumulate_in_out=True  -> f32 output, accumulate directly into o_ref.
       accumulate_in_out=False -> f32 VMEM scratch accumulator, cast on last k step."""
    if accumulate_in_out:
        def kernel(x_ref, w1_ref, b1_ref, w2_ref, b2_ref, o_ref):
            k = pl.program_id(1)

            @pl.when(k == 0)
            def _():
                o_ref[...] = jnp.broadcast_to(b2_ref[...], o_ref.shape)

            h = jnp.dot(x_ref[...], w1_ref[...], preferred_element_type=jnp.float32)
            h = _gelu_exact(h + b1_ref[...])  # bias + exact GELU in f32
            # Dropout(p=0.1): identity in eval mode (deterministic forward).
            # TODO(synk): training-mode dropout needs pltpu.prng_seed + prng_random_bits.
            o_ref[...] += jnp.dot(h.astype(w2_ref.dtype), w2_ref[...],
                                  preferred_element_type=jnp.float32)
        return kernel

    def kernel(x_ref, w1_ref, b1_ref, w2_ref, b2_ref, o_ref, acc_ref):
        k = pl.program_id(1)

        @pl.when(k == 0)
        def _():
            acc_ref[...] = jnp.zeros_like(acc_ref)

        h = jnp.dot(x_ref[...], w1_ref[...], preferred_element_type=jnp.float32)
        h = _gelu_exact(h + b1_ref[...])
        acc_ref[...] += jnp.dot(h.astype(w2_ref.dtype), w2_ref[...],
                                preferred_element_type=jnp.float32)

        @pl.when(k == pl.num_programs(1) - 1)
        def _():
            o_ref[...] = (acc_ref[...] + b2_ref[...]).astype(o_ref.dtype)
    return kernel


def prepare_mlp_params(w1, b1, w2, b2, compute_dtype=jnp.bfloat16):
    """Pad feature dims to 128 and cast weights ONCE (hoisted out of the hot path)."""
    b1 = jnp.asarray(b1).reshape(1, -1)
    b2 = jnp.asarray(b2).reshape(1, -1)
    d_in, d_hid = w1.shape
    d_out = w2.shape[1]
    d_in_p = _round_up(d_in, 128)
    d_hid_p = _round_up(d_hid, 128)
    d_out_p = _round_up(d_out, 128)
    # Zero-padding is numerically exact (zero contributions; GELU(0)=0; zero W2 rows).
    w1p = jnp.pad(w1, ((0, d_in_p - d_in), (0, d_hid_p - d_hid))).astype(compute_dtype)
    w2p = jnp.pad(w2, ((0, d_hid_p - d_hid), (0, d_out_p - d_out))).astype(compute_dtype)
    b1p = jnp.pad(b1, ((0, 0), (0, d_hid_p - d_hid))).astype(jnp.float32)
    b2p = jnp.pad(b2, ((0, 0), (0, d_out_p - d_out))).astype(jnp.float32)
    return (w1p, b1p, w2p, b2p), d_out


def _mlp_forward_impl(x, w1p, b1p, w2p, b2p, d_out, tm, tk):
    out_dtype = x.dtype
    cdt = w1p.dtype
    M, d_in = x.shape
    d_in_p, d_hid_p = w1p.shape
    d_out_p = w2p.shape[1]

    gen = _tpu_generation()
    row_align = 16 if cdt == jnp.bfloat16 else 8

    # Generation-aware tile targets (v6e: 128 MiB VMEM, compute-bound needs big tm;
    # v7x: 64 MiB/TC, ~310 flop/B threshold; v5e: small scoped-VMEM default).
    if tm is None:
        tm = {5: 256, 6: 512, 7: 384}.get(gen, 256)
    if tk is None:
        tk = 512

    tk_eff = _pick_tk(d_hid_p, tk)
    m_aligned = _round_up(M, row_align)
    tm_eff = min(_round_up(tm, row_align), m_aligned)

    # v7x: make sure the "parallel" row axis has >=2 tiles so both TCs get work.
    if gen == 7 and m_aligned >= 2 * row_align and tm_eff >= m_aligned:
        tm_eff = max(row_align, (m_aligned // 2) // row_align * row_align)

    use_scratch = out_dtype != jnp.float32
    cbytes = jnp.dtype(cdt).itemsize
    obytes = jnp.dtype(out_dtype).itemsize

    # Fit the tile footprint inside a generation-aware VMEM budget.
    budget = {5: 100 << 20, 6: 100 << 20, 7: 48 << 20}.get(gen, 48 << 20)
    while _vmem_bytes(tm_eff, tk_eff, d_in_p, d_out_p, cbytes, obytes, use_scratch) > budget:
        if tm_eff > row_align:
            tm_eff = max(row_align, (tm_eff // 2) // row_align * row_align)
        elif tk_eff > 128:
            tk_eff = _pick_tk(d_hid_p, tk_eff // 2)
        else:
            break

    M_p = _round_up(M, tm_eff)
    xp = jnp.pad(x, ((0, M_p - M), (0, d_in_p - d_in))).astype(cdt)

    grid = (M_p // tm_eff, d_hid_p // tk_eff)
    footprint = _vmem_bytes(tm_eff, tk_eff, d_in_p, d_out_p, cbytes, obytes, use_scratch)
    vmem_limit = int(min(budget, max(2 * footprint, 32 << 20)))

    # Advisory cost estimate for XLA scheduling around the custom call.
    flops = 2 * M_p * d_hid_p * (d_in_p + d_out_p)
    bytes_accessed = (grid[0] * (d_in_p * d_hid_p + d_hid_p * d_out_p) * cbytes
                      + M_p * d_in_p * cbytes + M_p * d_out_p * obytes
                      + (d_hid_p + d_out_p) * 4)
    cost = pl.CostEstimate(flops=flops, transcendentals=M_p * d_hid_p,
                           bytes_accessed=bytes_accessed)

    kernel = _make_kernel(accumulate_in_out=not use_scratch)
    scratch = (pltpu.VMEM((tm_eff, d_out_p), jnp.float32),) if use_scratch else ()

    out = pl.pallas_call(
        kernel,
        out_shape=jax.ShapeDtypeStruct((M_p, d_out_p), out_dtype),
        grid_spec=pltpu.PrefetchScalarGridSpec(
            num_scalar_prefetch=0,
            grid=grid,
            in_specs=[
                pl.BlockSpec((tm_eff, d_in_p), lambda i, k: (i, 0)),   # x tile (k-invariant)
                pl.BlockSpec((d_in_p, tk_eff), lambda i, k: (0, k)),   # W1 hidden tile
                pl.BlockSpec((1, tk_eff), lambda i, k: (0, k)),        # b1 hidden tile
                pl.BlockSpec((tk_eff, d_out_p), lambda i, k: (k, 0)),  # W2 hidden tile
                pl.BlockSpec((1, d_out_p), lambda i, k: (0, 0)),       # b2 (constant)
            ],
            out_specs=pl.BlockSpec((tm_eff, d_out_p), lambda i, k: (i, 0)),
            scratch_shapes=scratch,
        ),
        compiler_params=pltpu.CompilerParams(
            dimension_semantics=("parallel", "arbitrary"),
            vmem_limit_bytes=vmem_limit,
        ),
        cost_estimate=cost,
    )(xp, w1p, b1p, w2p, b2p)

    return out[:M, :d_out]


@functools.partial(jax.jit, static_argnames=("d_out", "tm", "tk"))
def mlp_forward(x, w1p, b1p, w2p, b2p, *, d_out, tm=None, tk=None):
    """x: [M, d_in] -> [M, d_out]; weights already padded/cast by prepare_mlp_params."""
    return _mlp_forward_impl(x, w1p, b1p, w2p, b2p, d_out, tm, tk)


def init_linear_params(key, fan_in, fan_out, dtype=jnp.float32):
    # Mirrors torch.nn.Linear default init: U(-1/sqrt(fan_in), +1/sqrt(fan_in)).
    kw, kb = jax.random.split(key)
    bound = 1.0 / math.sqrt(fan_in)
    w = jax.random.uniform(kw, (fan_in, fan_out), dtype, minval=-bound, maxval=bound)
    b = jax.random.uniform(kb, (1, fan_out), dtype, minval=-bound, maxval=bound)
    return w, b


def reference_mlp(x, w1, b1, w2, b2):
    h = x @ w1 + b1
    h = _gelu_exact(h)
    return h @ w2 + b2


if __name__ == "__main__":
    # config.d_latent = 32; d_in = d_out = d_latent; hidden = 4 * d_latent = 128
    d_latent = 32
    d_in, d_hid, d_out = d_latent, 4 * d_latent, d_latent
    batch, seq = 2, 8

    key = jax.random.PRNGKey(0)
    kx, k1, k2 = jax.random.split(key, 3)

    x = jax.random.normal(kx, (batch, seq, d_in), jnp.float32)
    w1, b1 = init_linear_params(k1, d_in, d_hid)
    w2, b2 = init_linear_params(k2, d_hid, d_out)

    # Glue: flatten leading dims to rows for the kernel, restore afterwards.
    x2d = x.reshape(batch * seq, d_in)
    ref2d = reference_mlp(x2d, w1, b1, w2, b2)

    # Default fast path: bf16 matmul operands, f32 accumulation, f32 output
    # (weights padded + cast once, outside the hot path).
    params_bf16, d_out_s = prepare_mlp_params(w1, b1, w2, b2, compute_dtype=jnp.bfloat16)
    out_fast = mlp_forward(x2d, *params_bf16, d_out=d_out_s)
    jax.block_until_ready(out_fast)
    assert out_fast.shape == ref2d.shape and out_fast.dtype == jnp.float32
    assert jnp.allclose(out_fast, ref2d, atol=7.5e-2, rtol=7.5e-2), "bf16-compute mismatch"

    # Full f32 path (tight tolerance vs pure-JAX reference).
    params_f32, _ = prepare_mlp_params(w1, b1, w2, b2, compute_dtype=jnp.float32)
    out_f32 = mlp_forward(x2d, *params_f32, d_out=d_out_s)
    jax.block_until_ready(out_f32)
    assert jnp.allclose(out_f32, ref2d, atol=1e-5, rtol=1e-5), "f32 mismatch vs reference"

    # bf16 input / bf16 output path (exercises the scratch-accumulator kernel variant).
    out_b = mlp_forward(x2d.astype(jnp.bfloat16), *params_bf16, d_out=d_out_s)
    jax.block_until_ready(out_b)
    assert out_b.dtype == jnp.bfloat16
    assert jnp.allclose(out_b.astype(jnp.float32), ref2d, atol=1.5e-1, rtol=1.5e-1), \
        "bf16-io mismatch vs reference"

    out = out_fast.reshape(batch, seq, d_out)
    jax.block_until_ready(out)

    print("KERNEL_OK")
</pallas_src>

<mosaic_0001>
module attributes {stable_mosaic.version = 11 : i64} {
  func.func @kernel(%arg0: i32, %arg1: i32, %arg2: memref<16x128xbf16, #tpu.memory_space<vmem>>, %arg3: memref<128x128xbf16, #tpu.memory_space<vmem>>, %arg4: memref<1x128xf32, #tpu.memory_space<vmem>>, %arg5: memref<128x128xbf16, #tpu.memory_space<vmem>>, %arg6: memref<1x128xf32, #tpu.memory_space<vmem>>, %arg7: memref<16x128xf32, #tpu.memory_space<vmem>>) attributes {dimension_semantics = [#tpu.dimension_semantics<parallel>, #tpu.dimension_semantics<arbitrary>], iteration_bounds = array<i64: 1, 1>, scalar_prefetch = 0 : i64, scratch_operands = 0 : i64, tpu.core_type = #tpu.core_type<tc>, window_params = [{transform_indices = @transform_0, window_bounds = array<i64: 16, 128>}, {transform_indices = @transform_1, window_bounds = array<i64: 128, 128>}, {transform_indices = @transform_2, window_bounds = array<i64: 1, 128>}, {transform_indices = @transform_3, window_bounds = array<i64: 128, 128>}, {pipeline_mode = #tpu.pipeline_mode<synchronous>, transform_indices = @transform_4, window_bounds = array<i64: 1, 128>}, {transform_indices = @transform_5, window_bounds = array<i64: 16, 128>}]} {
    %c0_i32 = arith.constant 0 : i32
    %0 = arith.cmpi eq, %arg1, %c0_i32 : i32
    %1 = arith.extui %0 : i1 to i32
    %c0_i32_0 = arith.constant 0 : i32
    %2 = arith.cmpi ne, %1, %c0_i32_0 : i32
    scf.if %2 {
      %c0_16 = arith.constant 0 : index
      %c0_17 = arith.constant 0 : index
      %23 = vector.load %arg6[%c0_16, %c0_17] : memref<1x128xf32, #tpu.memory_space<vmem>>, vector<1x128xf32>
      %24 = vector.shape_cast %23 : vector<1x128xf32> to vector<1x128xf32>
      %25 = vector.broadcast %24 : vector<1x128xf32> to vector<16x128xf32>
      %c0_18 = arith.constant 0 : index
      %c0_19 = arith.constant 0 : index
      %26 = vector.load %arg7[%c0_18, %c0_19] : memref<16x128xf32, #tpu.memory_space<vmem>>, vector<16x128xf32>
      tpu.vector_store %arg7[%c0_18, %c0_19], %25 {strides = array<i32>} : memref<16x128xf32, #tpu.memory_space<vmem>>, vector<16x128xf32>,
    } else {
    }
    %c0 = arith.constant 0 : index
    %c0_1 = arith.constant 0 : index
    %3 = vector.load %arg2[%c0, %c0_1] : memref<16x128xbf16, #tpu.memory_space<vmem>>, vector<16x128xbf16>
    %c0_2 = arith.constant 0 : index
    %c0_3 = arith.constant 0 : index
    %4 = vector.load %arg3[%c0_2, %c0_3] : memref<128x128xbf16, #tpu.memory_space<vmem>>, vector<128x128xbf16>
    %cst = arith.constant dense<0.000000e+00> : vector<16x128xf32>
    %5 = tpu.matmul %3, %4, %cst {dimension_numbers = #tpu.dot_dimension_numbers<[1], [0], [0], [1], [0, 0, 1, 1], [], []>} : vector<16x128xbf16>, vector<128x128xbf16>, vector<16x128xf32> -> vector<16x128xf32>
    %c0_4 = arith.constant 0 : index
    %c0_5 = arith.constant 0 : index
    %6 = vector.load %arg4[%c0_4, %c0_5] : memref<1x128xf32, #tpu.memory_space<vmem>>, vector<1x128xf32>
    %7 = vector.broadcast %6 : vector<1x128xf32> to vector<16x128xf32>
    %8 = arith.addf %5, %7 : vector<16x128xf32>
    %cst_6 = arith.constant 5.000000e-01 : f32
    %9 = vector.broadcast %cst_6 : f32 to vector<16x128xf32>
    %10 = arith.mulf %9, %8 : vector<16x128xf32>
    %cst_7 = arith.constant 0.707106769 : f32
    %11 = vector.broadcast %cst_7 : f32 to vector<16x128xf32>
    %12 = arith.mulf %8, %11 : vector<16x128xf32>
    %13 = math.erf %12 : vector<16x128xf32>
    %cst_8 = arith.constant 1.000000e+00 : f32
    %14 = vector.broadcast %cst_8 : f32 to vector<16x128xf32>
    %15 = arith.addf %14, %13 : vector<16x128xf32>
    %16 = arith.mulf %10, %15 : vector<16x128xf32>
    %c0_9 = arith.constant 0 : index
    %c0_10 = arith.constant 0 : index
    %17 = vector.load %arg7[%c0_9, %c0_10] : memref<16x128xf32, #tpu.memory_space<vmem>>, vector<16x128xf32>
    %18 = arith.truncf %16 : vector<16x128xf32> to vector<16x128xbf16>
    %c0_11 = arith.constant 0 : index
    %c0_12 = arith.constant 0 : index
    %19 = vector.load %arg5[%c0_11, %c0_12] : memref<128x128xbf16, #tpu.memory_space<vmem>>, vector<128x128xbf16>
    %cst_13 = arith.constant dense<0.000000e+00> : vector<16x128xf32>
    %20 = tpu.matmul %18, %19, %cst_13 {dimension_numbers = #tpu.dot_dimension_numbers<[1], [0], [0], [1], [0, 0, 1, 1], [], []>} : vector<16x128xbf16>, vector<128x128xbf16>, vector<16x128xf32> -> vector<16x128xf32>
    %21 = arith.addf %17, %20 : vector<16x128xf32>
    %c0_14 = arith.constant 0 : index
    %c0_15 = arith.constant 0 : index
    %22 = vector.load %arg7[%c0_14, %c0_15] : memref<16x128xf32, #tpu.memory_space<vmem>>, vector<16x128xf32>
    tpu.vector_store %arg7[%c0_14, %c0_15], %21 {strides = array<i32>} : memref<16x128xf32, #tpu.memory_space<vmem>>, vector<16x128xf32>,
    return
  }
  func.func @transform_0(%arg0: i32, %arg1: i32) -> (i32, i32) {
    %c0_i32 = arith.constant 0 : i32
    %c0_i32_0 = arith.constant 0 : i32
    return %arg0, %c0_i32 : i32, i32
  }
  func.func @transform_1(%arg0: i32, %arg1: i32) -> (i32, i32) {
    %c0_i32 = arith.constant 0 : i32
    %c0_i32_0 = arith.constant 0 : i32
    return %c0_i32, %arg1 : i32, i32
  }
  func.func @transform_2(%arg0: i32, %arg1: i32) -> (i32, i32) {
    %c0_i32 = arith.constant 0 : i32
    %c0_i32_0 = arith.constant 0 : i32
    return %c0_i32, %arg1 : i32, i32
  }
  func.func @transform_3(%arg0: i32, %arg1: i32) -> (i32, i32) {
    %c0_i32 = arith.constant 0 : i32
    %c0_i32_0 = arith.constant 0 : i32
    return %arg1, %c0_i32 : i32, i32
  }
  func.func @transform_4(%arg0: i32, %arg1: i32) -> (i32, i32) {
    %c0_i32 = arith.constant 0 : i32
    %c0_i32_0 = arith.constant 0 : i32
    %c0_i32_1 = arith.constant 0 : i32
    return %c0_i32, %c0_i32_0 : i32, i32
  }
  func.func @transform_5(%arg0: i32, %arg1: i32) -> (i32, i32) {
    %c0_i32 = arith.constant 0 : i32
    %c0_i32_0 = arith.constant 0 : i32
    return %arg0, %c0_i32 : i32, i32
  }
}

</mosaic_0001>

<llo_original>
// kernel: mlp_forward.1
$region0: #{mlp_forward.1}
  #allocation0 [shape = 'u32[]', space=smem, size = 0x4, offset = 0x4, fixed_abs, tag = 'smem constant byte address 0x4 - core index']
  #allocation1 [shape = 'u32[144,128]{1,0:T(1,128)}', space=vmem, size = 0x12000, scoped, tag = 'internal scratch']
  %s0 = inlined_call_operand.vmem [shape: bf16[16,128], index: 0, kind: input, shape index: {}]
  %s1 = inlined_call_operand.hbm [shape: bf16[128,128], index: 1, kind: input, shape index: {}]
  %s2 = inlined_call_operand.vmem [shape: f32[1,128], index: 2, kind: input, shape index: {}]
  %s3 = inlined_call_operand.hbm [shape: bf16[128,128], index: 3, kind: input, shape index: {}]
  %s4 = inlined_call_operand.vmem [shape: f32[1,128], index: 4, kind: input, shape index: {}]
  %s5 = inlined_call_operand.hbm [shape: f32[16,128], index: 5, kind: output, shape index: {}]
  %s6 = sld [smem:[#allocation0]]
  $region42: #{mlp_forward.1} parent=0
    _
  %s8 = ssub.s32 1, %s6
  %s9 = scalar_select 0, %s8, %s6
  $region1: #{mlp_forward.1} parent=0
    #allocation2 [shape = 'u8[32768]{0}', space=vmem, size = 0x8000, scoped, tag = 'input window, operand 1, single buffered']
    #allocation3 [shape = 's32[1]{0}', space=sflag, size = 0x4, scoped, tag = 'scoped memory for mlp_forward.1']
    #allocation4 [shape = 's32[1]{0}', space=sflag, size = 0x4, scoped, tag = 'scoped memory for mlp_forward.1']
    #allocation5 [shape = 'u8[32768]{0}', space=vmem, size = 0x8000, scoped, tag = 'input window, operand 3, single buffered']
    #allocation6 [shape = 's32[1]{0}', space=sflag, size = 0x4, scoped, tag = 'scoped memory for mlp_forward.1']
    #allocation7 [shape = 'u8[8192]{0}', space=vmem, size = 0x2000, scoped, tag = 'output window, operand 0, single buffered']
    %10 = vsyncpa [#allocation3], 0
    %11 = vsyncpa [#allocation6], 0
    %12 = vsyncpa [#allocation4], 0
    // Predicated region
    $region2: #{mlp_forward.1} parent=1 // pred_check
      _
    $region3: #{mlp_forward.1} parent=1 // pred_check_branch
      %14 = sbr.rel (0) target = $region5
    $region4: #{mlp_forward.1} parent=1 // pred_region
      _
    $region5: #{mlp_forward.1} parent=1 // pred_fallthru
      _
    // Predicated region
    $region6: #{mlp_forward.1} parent=1 // pred_check
      _
    $region7: #{mlp_forward.1} parent=1 // pred_check_branch
      %16 = sbr.rel (0) target = $region9
    $region8: #{mlp_forward.1} parent=1 // pred_region
      %s18 = ssub.s32 1024, 1024
      %19 = vsyncadd [#allocation3], %s18
      %s20 = sshll.u32 [#allocation2], 4
      %s21 = int_to_ptr.vmem [resolvable:$true] %s20
      %26 = dma.hbm_to_vmem [thread:$0]  %s1, 1024, %s21, [#allocation3], 64, 64, 4
    $region9: #{mlp_forward.1} parent=1 // pred_fallthru
      _
    // Predicated region
    $region10: #{mlp_forward.1} parent=1 // pred_check
      _
    $region11: #{mlp_forward.1} parent=1 // pred_check_branch
      %28 = sbr.rel (0) target = $region13
    $region12: #{mlp_forward.1} parent=1 // pred_region
      _
    $region13: #{mlp_forward.1} parent=1 // pred_fallthru
      _
    // Predicated region
    $region14: #{mlp_forward.1} parent=1 // pred_check
      _
    $region15: #{mlp_forward.1} parent=1 // pred_check_branch
      %30 = sbr.rel (0) target = $region17
    $region16: #{mlp_forward.1} parent=1 // pred_region
      %s32 = ssub.s32 1024, 1024
      %33 = vsyncadd [#allocation6], %s32
      %s34 = sshll.u32 [#allocation5], 4
      %s35 = int_to_ptr.vmem [resolvable:$true] %s34
      %40 = dma.hbm_to_vmem [thread:$0]  %s3, 1024, %s35, [#allocation6], 64, 64, 4
    $region17: #{mlp_forward.1} parent=1 // pred_fallthru
      _
    // Predicated region
    $region18: #{mlp_forward.1} parent=1 // pred_check
      _
    $region19: #{mlp_forward.1} parent=1 // pred_check_branch
      %42 = sbr.rel (0) target = $region21
    $region20: #{mlp_forward.1} parent=1 // pred_region
      _
    $region21: #{mlp_forward.1} parent=1 // pred_fallthru
      _
    // Predicated region
    $region22: #{mlp_forward.1} parent=1 // pred_check
      _
    $region23: #{mlp_forward.1} parent=1 // pred_check_branch
      %44 = sbr.rel (0) target = $region25
    $region24: #{mlp_forward.1} parent=1 // pred_region
      %45 = dma.done [#allocation3], 1024
    $region25: #{mlp_forward.1} parent=1 // pred_fallthru
      _
    // Predicated region
    $region26: #{mlp_forward.1} parent=1 // pred_check
      _
    $region27: #{mlp_forward.1} parent=1 // pred_check_branch
      %47 = sbr.rel (0) target = $region29
    $region28: #{mlp_forward.1} parent=1 // pred_region
      %48 = dma.done [#allocation6], 1024
    $region29: #{mlp_forward.1} parent=1 // pred_fallthru
      _
    %p50 = scmp.eq.s32.totalorder 0, 0
    // Predicated region
    $region30: #{mlp_forward.1} parent=1 // pred_check
      %p51 = pneg %p50
    $region31: #{mlp_forward.1} parent=1 // pred_check_branch
      %53 = sbr.rel (%p51) target = $region33
    $region32: #{mlp_forward.1} parent=1 // pred_region
      %v54 = vld [vmem:[%s4] sm:$0x1]
      %v56 = vlaneseq
      %v57 = vshrl.u32 %v56, 7
      %v58 = vsub.s32 0, %v57
      %v59 = vrot.slane %v54, %v58
      %61 = vst [vmem:[#allocation7] sm:$0xff] %v59
      %62 = vst [vmem:[#allocation7 + $0x8] sm:$0xff] %v59
    $region33: #{mlp_forward.1} parent=1 // pred_fallthru
      _
    %v63 = vld [vmem:[%s0] sm:$0xf]
    %v64 = vld [vmem:[%s0 + $0x4] sm:$0xf]
    %v65 = vld [vmem:[#allocation2] sm:$0xf]
    %v66 = vld [vmem:[#allocation2 + $0x4] sm:$0xf]
    %v67 = vld [vmem:[#allocation2 + $0x8] sm:$0xf]
    %v68 = vld [vmem:[#allocation2 + $0xc] sm:$0xf]
    %v69 = vld [vmem:[#allocation2 + $0x10] sm:$0xf]
    %v70 = vld [vmem:[#allocation2 + $0x14] sm:$0xf]
    %v71 = vld [vmem:[#allocation2 + $0x18] sm:$0xf]
    %v72 = vld [vmem:[#allocation2 + $0x1c] sm:$0xf]
    %v73 = vld [vmem:[#allocation2 + $0x20] sm:$0xf]
    %v74 = vld [vmem:[#allocation2 + $0x24] sm:$0xf]
    %v75 = vld [vmem:[#allocation2 + $0x28] sm:$0xf]
    %v76 = vld [vmem:[#allocation2 + $0x2c] sm:$0xf]
    %v77 = vld [vmem:[#allocation2 + $0x30] sm:$0xf]
    %v78 = vld [vmem:[#allocation2 + $0x34] sm:$0xf]
    %v79 = vld [vmem:[#allocation2 + $0x38] sm:$0xf]
    %v80 = vld [vmem:[#allocation2 + $0x3c] sm:$0xf]
    %v81 = vld [vmem:[%s2] sm:$0x1]
    %v83 = vlaneseq
    %v84 = vshrl.u32 %v83, 7
    %v85 = vsub.s32 0, %v84
    %v86 = vrot.slane %v81, %v85
    %v90 = vunpack.c.l.b16 %v63
    %v91 = vunpack.c.l.b16 %v64
    %v92 = vpack.c.b16 %v91, %v90
    %v110 = vunpack.c.l.b16 %v65
    %v111 = vunpack.c.l.b16 %v66
    %v112 = vunpack.c.l.b16 %v67
    %v113 = vunpack.c.l.b16 %v68
    %v114 = vunpack.c.l.b16 %v69
    %v115 = vunpack.c.l.b16 %v70
    %v116 = vunpack.c.l.b16 %v71
    %v117 = vunpack.c.l.b16 %v72
    %v118 = vunpack.c.l.b16 %v73
    %v119 = vunpack.c.l.b16 %v74
    %v120 = vunpack.c.l.b16 %v75
    %v121 = vunpack.c.l.b16 %v76
    %v122 = vunpack.c.l.b16 %v77
    %v123 = vunpack.c.l.b16 %v78
    %v124 = vunpack.c.l.b16 %v79
    %v125 = vunpack.c.l.b16 %v80
    %v126 = vpack.c.b16 %v111, %v110
    %v127 = vpack.c.b16 %v113, %v112
    %v128 = vpack.c.b16 %v115, %v114
    %v129 = vpack.c.b16 %v117, %v116
    %v130 = vpack.c.b16 %v119, %v118
    %v131 = vpack.c.b16 %v121, %v120
    %v132 = vpack.c.b16 %v123, %v122
    %v133 = vpack.c.b16 %v125, %v124
    %142 = vmatprep.subr.bf16.mxu0 0
    %143 = vmatpush1.bf16.msra.mxu0 %v133
    %144 = vmatprep.subr.bf16.mxu0 0
    %145 = vmatpush1.bf16.msra.mxu0 %v132
    %146 = vmatprep.subr.bf16.mxu0 0
    %147 = vmatpush1.bf16.msra.mxu0 %v131
    %148 = vmatprep.subr.bf16.mxu0 0
    %149 = vmatpush1.bf16.msra.mxu0 %v130
    %150 = vmatprep.subr.bf16.mxu0 0
    %151 = vmatpush1.bf16.msra.mxu0 %v129
    %152 = vmatprep.subr.bf16.mxu0 0
    %153 = vmatpush1.bf16.msra.mxu0 %v128
    %154 = vmatprep.subr.bf16.mxu0 0
    %155 = vmatpush1.bf16.msra.mxu0 %v127
    %156 = vmatprep.subr.bf16.mxu0 0
    %157 = vmatpush1.bf16.msra.mxu0 %v126
    %158 = vmatprep.subr.bf16.mxu0 0
    %159 = vmatpush2.bf16.msra.mxu0 0
    %160 = vmatprep.subr.bf16.mxu0 0
    %161 = vmatpush2.bf16.msra.mxu0 0
    %162 = vmatprep.subr.bf16.mxu0 0
    %163 = vmatpush2.bf16.msra.mxu0 0
    %164 = vmatprep.subr.bf16.mxu0 0
    %165 = vmatpush2.bf16.msra.mxu0 0
    %166 = vmatprep.subr.bf16.mxu0 0
    %167 = vmatpush2.bf16.msra.mxu0 0
    %168 = vmatprep.subr.bf16.mxu0 0
    %169 = vmatpush2.bf16.msra.mxu0 0
    %170 = vmatprep.subr.bf16.mxu0 0
    %171 = vmatpush2.bf16.msra.mxu0 0
    %172 = vmatprep.subr.bf16.mxu0 0
    %173 = vmatpush2.bf16.msra.mxu0 0
    %174 = vmatprep.mubr.bf16.mxu0 0
    %175 = vmatmul.mubr.bf16.gmra.mxu0 %v92
    %v176 = vpop.f32.mrf.mxu0
    %v177 = vadd.f32 %v86, %v176
    %v178 = vpop.f32.mrf.mxu0
    %v179 = vpop.f32.mrf.mxu0
    %v180 = vadd.f32 %v86, %v179
    %v181 = vpop.f32.mrf.mxu0
    %182 = vdwg.mxu0
    %v183 = vmul.f32 %v177, 0.5
    %v184 = vmul.f32 %v180, 0.5
    %v185 = vmul.f32 %v177, 0.70710677
    %v186 = vmul.f32 %v180, 0.70710677
    %v187 = verf.f32.pop %v185
    %v188 = verf.f32.pop %v186
    %v189 = vadd.f32 %v187, 1.0
    %v190 = vadd.f32 %v188, 1.0
    %v191 = vmul.f32 %v183, %v189
    %v192 = vmul.f32 %v184, %v190
    %v193 = vld [vmem:[#allocation7] sm:$0xff]
    %v194 = vld [vmem:[#allocation7 + $0x8] sm:$0xff]
    %v195 = vpack.c.bf16 %v192, %v191
    %v196 = vld [vmem:[#allocation5] sm:$0xf]
    %v197 = vld [vmem:[#allocation5 + $0x4] sm:$0xf]
    %v198 = vld [vmem:[#allocation5 + $0x8] sm:$0xf]
    %v199 = vld [vmem:[#allocation5 + $0xc] sm:$0xf]
    %v200 = vld [vmem:[#allocation5 + $0x10] sm:$0xf]
    %v201 = vld [vmem:[#allocation5 + $0x14] sm:$0xf]
    %v202 = vld [vmem:[#allocation5 + $0x18] sm:$0xf]
    %v203 = vld [vmem:[#allocation5 + $0x1c] sm:$0xf]
    %v204 = vld [vmem:[#allocation5 + $0x20] sm:$0xf]
    %v205 = vld [vmem:[#allocation5 + $0x24] sm:$0xf]
    %v206 = vld [vmem:[#allocation5 + $0x28] sm:$0xf]
    %v207 = vld [vmem:[#allocation5 + $0x2c] sm:$0xf]
    %v208 = vld [vmem:[#allocation5 + $0x30] sm:$0xf]
    %v209 = vld [vmem:[#allocation5 + $0x34] sm:$0xf]
    %v210 = vld [vmem:[#allocation5 + $0x38] sm:$0xf]
    %v211 = vld [vmem:[#allocation5 + $0x3c] sm:$0xf]
    %v228 = vunpack.c.l.b16 %v196
    %v229 = vunpack.c.l.b16 %v197
    %v230 = vunpack.c.l.b16 %v198
    %v231 = vunpack.c.l.b16 %v199
    %v232 = vunpack.c.l.b16 %v200
    %v233 = vunpack.c.l.b16 %v201
    %v234 = vunpack.c.l.b16 %v202
    %v235 = vunpack.c.l.b16 %v203
    %v236 = vunpack.c.l.b16 %v204
    %v237 = vunpack.c.l.b16 %v205
    %v238 = vunpack.c.l.b16 %v206
    %v239 = vunpack.c.l.b16 %v207
    %v240 = vunpack.c.l.b16 %v208
    %v241 = vunpack.c.l.b16 %v209
    %v242 = vunpack.c.l.b16 %v210
    %v243 = vunpack.c.l.b16 %v211
    %v244 = vpack.c.b16 %v229, %v228
    %v245 = vpack.c.b16 %v231, %v230
    %v246 = vpack.c.b16 %v233, %v232
    %v247 = vpack.c.b16 %v235, %v234
    %v248 = vpack.c.b16 %v237, %v236
    %v249 = vpack.c.b16 %v239, %v238
    %v250 = vpack.c.b16 %v241, %v240
    %v251 = vpack.c.b16 %v243, %v242
    %260 = vmatprep.subr.bf16.mxu0 0
    %261 = vmatpush1.bf16.msra.mxu0 %v251
    %262 = vmatprep.subr.bf16.mxu0 0
    %263 = vmatpush1.bf16.msra.mxu0 %v250
    %264 = vmatprep.subr.bf16.mxu0 0
    %265 = vmatpush1.bf16.msra.mxu0 %v249
    %266 = vmatprep.subr.bf16.mxu0 0
    %267 = vmatpush1.bf16.msra.mxu0 %v248
    %268 = vmatprep.subr.bf16.mxu0 0
    %269 = vmatpush1.bf16.msra.mxu0 %v247
    %270 = vmatprep.subr.bf16.mxu0 0
    %271 = vmatpush1.bf16.msra.mxu0 %v246
    %272 = vmatprep.subr.bf16.mxu0 0
    %273 = vmatpush1.bf16.msra.mxu0 %v245
    %274 = vmatprep.subr.bf16.mxu0 0
    %275 = vmatpush1.bf16.msra.mxu0 %v244
    %276 = vmatprep.subr.bf16.mxu0 0
    %277 = vmatpush2.bf16.msra.mxu0 0
    %278 = vmatprep.subr.bf16.mxu0 0
    %279 = vmatpush2.bf16.msra.mxu0 0
    %280 = vmatprep.subr.bf16.mxu0 0
    %281 = vmatpush2.bf16.msra.mxu0 0
    %282 = vmatprep.subr.bf16.mxu0 0
    %283 = vmatpush2.bf16.msra.mxu0 0
    %284 = vmatprep.subr.bf16.mxu0 0
    %285 = vmatpush2.bf16.msra.mxu0 0
    %286 = vmatprep.subr.bf16.mxu0 0
    %287 = vmatpush2.bf16.msra.mxu0 0
    %288 = vmatprep.subr.bf16.mxu0 0
    %289 = vmatpush2.bf16.msra.mxu0 0
    %290 = vmatprep.subr.bf16.mxu0 0
    %291 = vmatpush2.bf16.msra.mxu0 0
    %292 = vmatprep.mubr.bf16.mxu0 0
    %293 = vmatmul.mubr.bf16.gmra.mxu0 %v195
    %v294 = vpop.f32.mrf.mxu0
    %v295 = vadd.f32 0.0, %v294
    %v296 = vpop.f32.mrf.mxu0
    %v297 = vpop.f32.mrf.mxu0
    %v298 = vadd.f32 0.0, %v297
    %v299 = vpop.f32.mrf.mxu0
    %300 = vdwg.mxu0
    %v301 = vadd.f32 %v193, %v295
    %v302 = vadd.f32 %v194, %v298
    %303 = vst [vmem:[#allocation7] sm:$0xff] %v301
    %304 = vst [vmem:[#allocation7 + $0x8] sm:$0xff] %v302
    // Predicated region
    $region34: #{mlp_forward.1} parent=1 // pred_check
      _
    $region35: #{mlp_forward.1} parent=1 // pred_check_branch
      %306 = sbr.rel (0) target = $region37
    $region36: #{mlp_forward.1} parent=1 // pred_region
      %s308 = ssub.s32 256, 256
      %309 = vsyncadd [#allocation4], %s308
      %s310 = sshll.u32 [#allocation7], 4
      %s311 = int_to_ptr.vmem [resolvable:$true] %s310
      %316 = dma.vmem_to_hbm [thread:$0]  %s311, 256, %s5, [#allocation4], 128, 128, 8
    $region37: #{mlp_forward.1} parent=1 // pred_fallthru
      _
    // Predicated region
    $region38: #{mlp_forward.1} parent=1 // pred_check
      _
    $region39: #{mlp_forward.1} parent=1 // pred_check_branch
      %318 = sbr.rel (0) target = $region41
    $region40: #{mlp_forward.1} parent=1 // pred_region
      %319 = dma.done [#allocation4], 256
    $region41: #{mlp_forward.1} parent=1 // pred_fallthru
      _
    %320 = vsyncpa [#allocation3], 1
    %321 = vsyncpa [#allocation6], 1
    %322 = vsyncpa [#allocation4], 1

</llo_original>
